<compile_context>
chip_gen: v6e
topology: v6e:2x2x1
jax: 0.10.0
libtpu: 0.0.40
codegen_flags: <defaults>
</compile_context>

<pallas_src>
import functools
import math

import jax
import jax.numpy as jnp
from jax.experimental import pallas as pl
from jax.experimental.pallas import tpu as pltpu

_NEG_LOG_10000 = -math.log(10000.0)


# ---------------------------------------------------------------------------
# In-kernel pe generation (f32).
# ---------------------------------------------------------------------------
def _pe_values(pos_f32, d_idx, d_model):
    """pe[pos, d] in f32 for broadcast `pos` (f32) and feature index `d` (i32)."""
    parity = jnp.bitwise_and(d_idx, 1)                    # 0 = even lane, 1 = odd
    two_i = (d_idx - parity).astype(jnp.float32)          # 2 * (d // 2)
    inv_freq = jnp.exp(two_i * (_NEG_LOG_10000 / d_model))
    angle = pos_f32 * inv_freq
    return jnp.where(parity == 0, jnp.sin(angle), jnp.cos(angle))


def pos_enc_kernel_3d(x_ref, o_ref):
    # x_ref/o_ref: (tile_s, B, D).  pe only depends on (pos, d): compute it once
    # at (tile_s, 1, D) and let the add broadcast over the batch (sublane) axis,
    # so the trig cost is divided by B (EUP/VPU filler under the HBM roofline).
    tile_s, _, d_model = x_ref.shape
    pos = (pl.program_id(0) * tile_s
           + jax.lax.broadcasted_iota(jnp.int32, (tile_s, 1, d_model), 0)
           ).astype(jnp.float32)
    d_idx = jax.lax.broadcasted_iota(jnp.int32, (tile_s, 1, d_model), 2)
    pe = _pe_values(pos, d_idx, d_model)                  # (tile_s, 1, D), f32
    o_ref[...] = (x_ref[...].astype(jnp.float32) + pe).astype(o_ref.dtype)


def pos_enc_kernel_flat(x_ref, o_ref, *, d_model):
    # x_ref/o_ref: (tile_s, B*D) lane-dense flattened view.
    # lane j holds (batch = j // D, feature d = j % D); pe ignores the batch.
    tile_s, lanes = x_ref.shape
    pos = (pl.program_id(0) * tile_s
           + jax.lax.broadcasted_iota(jnp.int32, (tile_s, lanes), 0)
           ).astype(jnp.float32)
    d_idx = jax.lax.broadcasted_iota(jnp.int32, (tile_s, lanes), 1) % d_model
    pe = _pe_values(pos, d_idx, d_model)                  # (tile_s, B*D), f32
    o_ref[...] = (x_ref[...].astype(jnp.float32) + pe).astype(o_ref.dtype)


# ---------------------------------------------------------------------------
# Host-side pe buffer (reference only — the kernel never reads it).
# ---------------------------------------------------------------------------
def make_positional_encoding(d_model: int, max_sequence_length: int) -> jnp.ndarray:
    position = jnp.arange(max_sequence_length, dtype=jnp.float32)[:, None]   # (L, 1)
    div_term = jnp.exp(
        jnp.arange(0, d_model, 2, dtype=jnp.float32) * (-math.log(10000.0) / d_model)
    )                                                                         # (D/2,)
    angles = position * div_term                                              # (L, D/2)
    pe = jnp.zeros((max_sequence_length, 1, d_model), dtype=jnp.float32)
    pe = pe.at[:, 0, 0::2].set(jnp.sin(angles))
    pe = pe.at[:, 0, 1::2].set(jnp.cos(angles))
    return pe


# ---------------------------------------------------------------------------
# Tile selection.
# ---------------------------------------------------------------------------
def _choose_tile_s(S: int, row_elems: int, itemsize: int) -> int:
    row_bytes = max(row_elems * itemsize, 1)
    # (a) ~4 MiB of x per tile: double-buffered x+out working set ~16 MiB,
    #     under every generation's scoped-VMEM default (incl. v7x's 32 MiB).
    tile = max(8, (4 << 20) // row_bytes)
    tile -= tile % 8
    tile = min(tile, S)
    # (b) keep a few grid steps so the "parallel" axis can shard across both
    #     v7x TensorCores (a handful of extra steps is noise on v5e/v6e).
    target_steps = min(4, max(1, S // 8))
    if target_steps > 1:
        cap = -(-S // target_steps)              # ceil(S / target_steps)
        cap = ((cap + 7) // 8) * 8               # round up to a sublane multiple
        tile = min(tile, cap)
    # (c) sublane alignment on the tiled axis (a tile covering all of S is
    #     always legal); no "exact divisor" shrink — one masked edge block is
    #     cheaper than more, smaller grid steps.
    if tile < S and tile % 8:
        tile = max(8, tile - tile % 8)
    return max(1, min(tile, S))
    # TODO(synk): for pathological rows (B*D*itemsize >> 4 MiB) the batch axis
    # should be tiled too; out of scope here.


# ---------------------------------------------------------------------------
# Forward: x + pe[:S], pe generated inside the Pallas kernel.
# ---------------------------------------------------------------------------
def positional_encoding_forward(x: jnp.ndarray, *, tile_s: int | None = None,
                                donate_x: bool = False) -> jnp.ndarray:
    S, B, D = x.shape
    itemsize = jnp.dtype(x.dtype).itemsize
    if tile_s is None:
        tile_s = _choose_tile_s(S, B * D, itemsize)
    tile_s = max(1, min(int(tile_s), S))

    # Lane/sublane-dense layout gate: for small D or small B the (B, D) slab of
    # the 3-D layout pads to (8, 128) (masked partial stores, up to 16x vreg
    # waste), so flatten to (S, B*D).  The reshape is a free bit-identical view.
    flatten = (D % 128 != 0) or (B < 8)
    if flatten and tile_s < S and tile_s % 8:
        tile_s = min(S, max(8, tile_s - tile_s % 8))   # sublane-aligned rows

    grid = (pl.cdiv(S, tile_s),)

    # Double-buffered x + out working set; give the compiler headroom but cap
    # at 48 MiB so a tile choice tuned on v5e/v6e cannot spill v7x's 64 MiB VMEM.
    working = 4 * tile_s * B * D * itemsize
    vmem_limit = int(min(48 << 20, max(32 << 20, working + (4 << 20))))
    params = pltpu.CompilerParams(
        dimension_semantics=("parallel",),
        vmem_limit_bytes=vmem_limit,
    )
    aliases = {0: 0} if donate_x else {}

    if flatten:
        xf = x.reshape(S, B * D)
        out = pl.pallas_call(
            functools.partial(pos_enc_kernel_flat, d_model=D),
            out_shape=jax.ShapeDtypeStruct((S, B * D), x.dtype),
            grid=grid,
            in_specs=[pl.BlockSpec((tile_s, B * D), lambda i: (i, 0))],
            out_specs=pl.BlockSpec((tile_s, B * D), lambda i: (i, 0)),
            compiler_params=params,
            input_output_aliases=aliases,
        )(xf)
        return out.reshape(S, B, D)

    return pl.pallas_call(
        pos_enc_kernel_3d,
        out_shape=jax.ShapeDtypeStruct((S, B, D), x.dtype),
        grid=grid,
        in_specs=[pl.BlockSpec((tile_s, B, D), lambda i: (i, 0, 0))],
        out_specs=pl.BlockSpec((tile_s, B, D), lambda i: (i, 0, 0)),
        compiler_params=params,
        input_output_aliases=aliases,
    )(x)


class PositionalEncoding:
    """Mirror of the PyTorch module. The pe buffer is kept only for inspection;
    the forward pass regenerates pe inside the kernel (f32), so there is no
    per-call slice/cast and no pe HBM stream."""

    def __init__(self, d_model: int, max_sequence_length: int):
        self.d_model = d_model
        self.max_sequence_length = max_sequence_length
        self.pe = make_positional_encoding(d_model, max_sequence_length)

    def __call__(self, x: jnp.ndarray) -> jnp.ndarray:
        S, _, D = x.shape
        if D != self.d_model:
            raise ValueError(f"d_model mismatch: {D} != {self.d_model}")
        if S > self.max_sequence_length:
            raise ValueError(
                f"sequence length {S} exceeds max_sequence_length "
                f"{self.max_sequence_length}")
        return positional_encoding_forward(x)


if __name__ == "__main__":
    key = jax.random.PRNGKey(0)

    d_model, max_len = 32, 64
    module = PositionalEncoding(d_model, max_len)
    pe_ref = make_positional_encoding(d_model, max_len)      # host f32 reference

    # 1) Module shape: seq=8, batch=2, d_model=32 (f32) — flattened lane-dense path.
    S, B = 8, 2
    x = jax.random.normal(key, (S, B, d_model), dtype=jnp.float32)
    out = jax.block_until_ready(module(x))
    assert out.shape == (S, B, d_model)
    assert jnp.allclose(out, x + pe_ref[:S], atol=1e-4, rtol=1e-4)

    # 2) Multi-step grid path: 4 sequence tiles of 16 rows (f32).
    S2 = 64
    x2 = jax.random.normal(jax.random.fold_in(key, 1), (S2, B, d_model),
                           dtype=jnp.float32)
    out2 = jax.block_until_ready(positional_encoding_forward(x2, tile_s=16))
    assert jnp.allclose(out2, x2 + pe_ref[:S2], atol=1e-4, rtol=1e-4)

    # 3) bf16 storage path: f32 pe + f32 add inside the kernel, bf16 store.
    x3 = x2.astype(jnp.bfloat16)
    out3 = jax.block_until_ready(positional_encoding_forward(x3, tile_s=16))
    ref3 = (x3.astype(jnp.float32) + pe_ref[:S2]).astype(jnp.bfloat16)
    assert out3.dtype == jnp.bfloat16
    assert jnp.allclose(out3.astype(jnp.float32), ref3.astype(jnp.float32),
                        atol=2e-2, rtol=2e-2)

    # 4) "Real transformer" layout path: D % 128 == 0, B >= 8 -> 3-D blocks,
    #    pe computed once per (tile_s, 1, D) and broadcast over batch.
    d_big = 128
    x4 = jax.random.normal(jax.random.fold_in(key, 2), (S2, 8, d_big),
                           dtype=jnp.float32)
    out4 = jax.block_until_ready(positional_encoding_forward(x4))
    pe_big = make_positional_encoding(d_big, S2)
    assert jnp.allclose(out4, x4 + pe_big[:S2], atol=1e-4, rtol=1e-4)

    print("KERNEL_OK")
</pallas_src>

<mosaic_0001>
module attributes {stable_mosaic.version = 11 : i64} {
  func.func @pos_enc_kernel_flat(%arg0: i32, %arg1: memref<8x64xf32, #tpu.memory_space<vmem>>, %arg2: memref<8x64xf32, #tpu.memory_space<vmem>>) attributes {dimension_semantics = [#tpu.dimension_semantics<parallel>], iteration_bounds = array<i64: 1>, scalar_prefetch = 0 : i64, scratch_operands = 0 : i64, tpu.core_type = #tpu.core_type<tc>, window_params = [{transform_indices = @transform_0, window_bounds = array<i64: 8, 64>}, {transform_indices = @transform_1, window_bounds = array<i64: 8, 64>}]} {
    %c8_i32 = arith.constant 8 : i32
    %0 = arith.muli %arg0, %c8_i32 : i32
    %1 = tpu.iota {dimensions = array<i32: 0>} : vector<8x64xi32>
    %2 = vector.broadcast %0 : i32 to vector<8x64xi32>
    %3 = arith.addi %2, %1 : vector<8x64xi32>
    %4 = arith.sitofp %3 : vector<8x64xi32> to vector<8x64xf32>
    %5 = tpu.iota {dimensions = array<i32: 1>} : vector<8x64xi32>
    %c32_i32 = arith.constant 32 : i32
    %c0_i32 = arith.constant 0 : i32
    %6 = arith.cmpi eq, %c32_i32, %c0_i32 : i32
    %c1_i32 = arith.constant 1 : i32
    %7 = arith.select %6, %c1_i32, %c32_i32 : i32
    %8 = vector.broadcast %7 : i32 to vector<8x64xi32>
    %9 = arith.remsi %5, %8 : vector<8x64xi32>
    %c0_i32_0 = arith.constant 0 : i32
    %10 = vector.broadcast %c0_i32_0 : i32 to vector<8x64xi32>
    %11 = arith.cmpi ne, %9, %10 : vector<8x64xi32>
    %c0_i32_1 = arith.constant 0 : i32
    %12 = vector.broadcast %c0_i32_1 : i32 to vector<8x64xi32>
    %13 = arith.cmpi slt, %9, %12 : vector<8x64xi32>
    %c0_i32_2 = arith.constant 0 : i32
    %14 = arith.cmpi slt, %7, %c0_i32_2 : i32
    %15 = vector.broadcast %14 : i1 to vector<8x64xi1>
    %16 = vector.broadcast %15 : vector<8x64xi1> to vector<8x64xi1>
    %17 = arith.xori %13, %16 : vector<8x64xi1>
    %18 = arith.andi %17, %11 : vector<8x64xi1>
    %19 = vector.broadcast %7 : i32 to vector<8x64xi32>
    %20 = arith.addi %9, %19 : vector<8x64xi32>
    %21 = arith.select %18, %20, %9 : vector<8x64xi1>, vector<8x64xi32>
    %c1_i32_3 = arith.constant 1 : i32
    %22 = vector.broadcast %c1_i32_3 : i32 to vector<8x64xi32>
    %23 = arith.andi %21, %22 : vector<8x64xi32>
    %24 = arith.subi %21, %23 : vector<8x64xi32>
    %25 = arith.sitofp %24 : vector<8x64xi32> to vector<8x64xf32>
    %cst = arith.constant -0.287823141 : f32
    %26 = vector.broadcast %cst : f32 to vector<8x64xf32>
    %27 = arith.mulf %25, %26 : vector<8x64xf32>
    %28 = math.exp %27 : vector<8x64xf32>
    %29 = arith.mulf %4, %28 : vector<8x64xf32>
    %c0_i32_4 = arith.constant 0 : i32
    %30 = vector.broadcast %c0_i32_4 : i32 to vector<8x64xi32>
    %31 = arith.cmpi eq, %23, %30 : vector<8x64xi32>
    %32 = math.sin %29 : vector<8x64xf32>
    %33 = math.cos %29 : vector<8x64xf32>
    %34 = arith.select %31, %32, %33 : vector<8x64xi1>, vector<8x64xf32>
    %c0 = arith.constant 0 : index
    %c0_5 = arith.constant 0 : index
    %35 = vector.load %arg1[%c0, %c0_5] : memref<8x64xf32, #tpu.memory_space<vmem>>, vector<8x64xf32>
    %36 = arith.addf %35, %34 : vector<8x64xf32>
    %c0_6 = arith.constant 0 : index
    %c0_7 = arith.constant 0 : index
    %37 = vector.load %arg2[%c0_6, %c0_7] : memref<8x64xf32, #tpu.memory_space<vmem>>, vector<8x64xf32>
    tpu.vector_store %arg2[%c0_6, %c0_7], %36 {strides = array<i32>} : memref<8x64xf32, #tpu.memory_space<vmem>>, vector<8x64xf32>,
    return
  }
  func.func @transform_0(%arg0: i32) -> (i32, i32) {
    %c0_i32 = arith.constant 0 : i32
    %c0_i32_0 = arith.constant 0 : i32
    return %arg0, %c0_i32 : i32, i32
  }
  func.func @transform_1(%arg0: i32) -> (i32, i32) {
    %c0_i32 = arith.constant 0 : i32
    %c0_i32_0 = arith.constant 0 : i32
    return %arg0, %c0_i32 : i32, i32
  }
}

</mosaic_0001>

<llo_original>
// kernel: tpu_custom_call.1
$region0: #{tpu_custom_call.1}
  #allocation0 [shape = 'u32[]', space=smem, size = 0x4, offset = 0x4, fixed_abs, tag = 'smem constant byte address 0x4 - core index']
  #allocation1 [shape = 'u32[144,128]{1,0:T(1,128)}', space=vmem, size = 0x12000, scoped, tag = 'internal scratch']
  %s0 = inlined_call_operand.hbm [shape: f32[8,64], index: 0, kind: input, shape index: {}]
  %s1 = inlined_call_operand.hbm [shape: f32[8,64], index: 1, kind: output, shape index: {}]
  %s2 = sld [smem:[#allocation0]]
  $region18: #{tpu_custom_call.1} parent=0
    _
  %s4 = ssub.s32 1, %s2
  %s5 = scalar_select 0, %s4, %s2
  $region1: #{tpu_custom_call.1} parent=0
    #allocation2 [shape = 'u8[4096]{0}', space=vmem, size = 0x1000, scoped, tag = 'input window, operand 0, single buffered']
    #allocation3 [shape = 's32[1]{0}', space=sflag, size = 0x4, scoped, tag = 'scoped memory for tpu_custom_call.1']
    #allocation4 [shape = 's32[1]{0}', space=sflag, size = 0x4, scoped, tag = 'scoped memory for tpu_custom_call.1']
    #allocation5 [shape = 'u8[4096]{0}', space=vmem, size = 0x1000, scoped, tag = 'output window, operand 0, single buffered']
    %6 = vsyncpa [#allocation3], 0
    %7 = vsyncpa [#allocation4], 0
    // Predicated region
    $region2: #{tpu_custom_call.1} parent=1 // pred_check
      _
    $region3: #{tpu_custom_call.1} parent=1 // pred_check_branch
      %9 = sbr.rel (0) target = $region5
    $region4: #{tpu_custom_call.1} parent=1 // pred_region
      %s11 = ssub.s32 128, 128
      %12 = vsyncadd [#allocation3], %s11
      %s14 = sshll.u32 [#allocation2], 4
      %s15 = int_to_ptr.vmem [resolvable:$true] %s14
      %17 = dma.hbm_to_vmem [thread:$0]  %s0, 128, %s15, [#allocation3]
    $region5: #{tpu_custom_call.1} parent=1 // pred_fallthru
      _
    // Predicated region
    $region6: #{tpu_custom_call.1} parent=1 // pred_check
      _
    $region7: #{tpu_custom_call.1} parent=1 // pred_check_branch
      %19 = sbr.rel (0) target = $region9
    $region8: #{tpu_custom_call.1} parent=1 // pred_region
      %20 = dma.done [#allocation3], 128
    $region9: #{tpu_custom_call.1} parent=1 // pred_fallthru
      _
    %s21 = smul.u32 0, 8
    %v22 = vlaneseq
    %v23 = vshrl.u32 %v22, 7
    %v24 = vstv %s21
    %v25 = vadd.s32 %v24, %v23
    %v26 = vcvt.s32.f32 %v25
    %v27 = vlaneseq
    %v28 = vand.u32 %v27, 127
    %vm29 = vcmp.lt.s32.totalorder %v28, 0
    %v30 = vsub.s32 0, %v28
    %v31 = vsel %vm29, %v30, %v28
    %v32 = vshrl.u32 %v31, 5
    %v33 = vand.u32 %v31, 31
    %v34 = vsub.s32 0, %v33
    %v35 = vsel %vm29, %v34, %v33
    %vm36 = vcmp.ne.s32.totalorder %v35, 0
    %vm37 = vcmp.lt.s32.totalorder %v35, 0
    %vm38 = vmand %vm37, %vm36
    %v39 = vadd.s32 %v35, 32
    %v40 = vsel %vm38, %v39, %v35
    %v41 = vand.u32 %v40, 1
    %v42 = vsub.s32 %v40, %v41
    %v43 = vcvt.s32.f32 %v42
    %v44 = vmul.f32 %v43, -0.28782314
    %v45 = vmul.f32 %v44, 1.442695
    %v46 = vpow.pop %v45
    %v47 = vmul.f32 %v26, %v46
    %vm48 = vcmp.eq.s32.totalorder %v41, 0
    %v49 = vand.u32 2147483647, %v47
    %vm50 = vcmp.le.f32.partialorder %v49, 0.7853982
    %vm51 = vcmp.lt.s32.totalorder %v47, 0
    %v52 = vand.u32 %v47, 2139095040
    %v53 = vshrl.u32 %v52, 23
    %v54 = vsub.s32 %v53, 127
    %v55 = vand.u32 2147483647, %v47
    %v56 = vand.u32 %v55, 8388607
    %v57 = vor.u32 %v56, 8388608
    %v58 = vsub.s32 0, %v57
    %v59 = vadd.s32 %v54, 1
    %vm60 = vcmp.gt.s32.totalorder %v59, 0
    %v61 = vsel %vm60, %v59, 0
    %v62 = vshrl.u32 %v61, 5
    %v63 = vand.u32 %v61, 31
    %v64 = vsub.s32 32, %v63
    %v65 = vshrl.u32 683565275, %v64
    %v66 = vshll.u32 683565275, %v63
    %v67 = vshrl.u32 2475754826, %v64
    %v68 = vor.u32 %v66, %v67
    %v69 = vshll.u32 2475754826, %v63
    %v70 = vshrl.u32 2131351028, %v64
    %v71 = vor.u32 %v69, %v70
    %v72 = vshll.u32 2131351028, %v63
    %v73 = vshrl.u32 2102212464, %v64
    %v74 = vor.u32 %v72, %v73
    %v75 = vshll.u32 2102212464, %v63
    %v76 = vshrl.u32 920167782, %v64
    %v77 = vor.u32 %v75, %v76
    %v78 = vshll.u32 920167782, %v63
    %v79 = vshrl.u32 1326507024, %v64
    %v80 = vor.u32 %v78, %v79
    %vm81 = vcmp.lt.s32.totalorder %v62, 1
    %vm82 = vcmp.lt.s32.totalorder %v62, 2
    %vm83 = vcmp.lt.s32.totalorder %v62, 3
    %vm84 = vcmp.lt.s32.totalorder %v62, 4
    %v85 = vsel %vm81, %v65, %v68
    %v86 = vsel %vm84, %v74, 2102212464
    %v87 = vsel %vm83, %v71, %v86
    %v88 = vsel %vm82, %v85, %v87
    %v89 = vsel %vm81, %v68, %v71
    %v90 = vsel %vm84, %v77, 920167782
    %v91 = vsel %vm83, %v74, %v90
    %v92 = vsel %vm82, %v89, %v91
    %v93 = vsel %vm81, %v71, %v74
    %v94 = vsel %vm84, %v80, 1326507024
    %v95 = vsel %vm83, %v77, %v94
    %v96 = vsel %vm82, %v93, %v95
    %v97 = vshll.u32 %v57, 8
    %v98 = vmul.u32.u64.compose %v97, %v96
    %v99 = vextract.low.u32 %v98
    %v100 = vextract.high.u32 %v98
    %v101 = vmul.u32.u64.compose %v97, %v92
    %v102 = vextract.low.u32 %v101
    %v103 = vextract.high.u32 %v101
    %v104 = vmul.u32 %v97, %v88
    %v105 = vadd.s32 %v100, %v102
    %vm106 = vc.u32 %v100, %v102
    %v107 = vadd.s32 %v103, 1
    %v108 = vsel %vm106, %v107, %v103
    %v109 = vadd.s32 %v104, %v108
    %v110 = vadd.s32 %v109, 536870912
    %v111 = vshrl.u32 %v110, 30
    %v112 = vshll.u32 %v111, 30
    %v113 = vsub.s32 %v109, %v112
    %vm114 = vcmp.lt.s32.totalorder %v113, 0
    %v115 = vsub.s32 0, %v113
    %v116 = vsel %vm114, %v115, %v113
    %v117 = vclz %v116
    %v118 = vsub.s32 %v117, 2
    %vm119 = vcmp.gt.s32.totalorder 0, %v118
    %v120 = vsel %vm119, 0, %v118
    %v121 = vsub.s32 32, %v120
    %v122 = vshll.u32 %v113, %v120
    %v123 = vshrl.u32 %v105, %v121
    %v124 = vor.u32 %v122, %v123
    %v125 = vsub.s32 4294967266, %v120
    %v126 = vadd.s32 %v125, 127
    %v127 = vshll.u32 %v126, 23
    %v128 = vor.u32 4788187, %v127
    %v129 = vand.u32 2147483647, %v128
    %v131 = vcvt.s32.f32 %v124
    %v132 = vmul.f32 %v131, %v129
    %v133 = vxor.u32 %v132, 2147483648
    %v134 = vsel %vm51, %v133, %v132
    %v135 = vsub.s32 4, %v111
    %v136 = vsel %vm51, %v135, %v111
    %v137 = vsel %vm50, %v47, %v134
    %v138 = vsel %vm50, 0, %v136
    %v139 = vcosq.f32.pop %v137
    %v140 = vsinq.f32.pop %v137
    %vm141 = vweird.f32 %v47
    %v142 = vadd.s32 %v138, 3
    %v143 = vand.u32 %v142, 3
    %vm144 = vcmp.lt.s32.totalorder %v143, 2
    %vm145 = vcmp.eq.s32.totalorder %v143, 0
    %v146 = vxor.u32 %v140, 2147483648
    %v147 = vsel %vm145, %v139, %v146
    %vm148 = vcmp.eq.s32.totalorder %v143, 2
    %v149 = vxor.u32 %v139, 2147483648
    %v150 = vsel %vm148, %v149, %v140
    %v151 = vsel %vm144, %v147, %v150
    %v152 = vsel %vm141, nan, %v151
    %v153 = vand.u32 2147483647, %v47
    %vm154 = vcmp.le.f32.partialorder %v153, 0.7853982
    %vm155 = vcmp.lt.s32.totalorder %v47, 0
    %v156 = vand.u32 %v47, 2139095040
    %v157 = vshrl.u32 %v156, 23
    %v158 = vsub.s32 %v157, 127
    %v159 = vand.u32 2147483647, %v47
    %v160 = vand.u32 %v159, 8388607
    %v161 = vor.u32 %v160, 8388608
    %v162 = vsub.s32 0, %v161
    %v163 = vadd.s32 %v158, 1
    %vm164 = vcmp.gt.s32.totalorder %v163, 0
    %v165 = vsel %vm164, %v163, 0
    %v166 = vshrl.u32 %v165, 5
    %v167 = vand.u32 %v165, 31
    %v168 = vsub.s32 32, %v167
    %v169 = vshrl.u32 683565275, %v168
    %v170 = vshll.u32 683565275, %v167
    %v171 = vshrl.u32 2475754826, %v168
    %v172 = vor.u32 %v170, %v171
    %v173 = vshll.u32 2475754826, %v167
    %v174 = vshrl.u32 2131351028, %v168
    %v175 = vor.u32 %v173, %v174
    %v176 = vshll.u32 2131351028, %v167
    %v177 = vshrl.u32 2102212464, %v168
    %v178 = vor.u32 %v176, %v177
    %v179 = vshll.u32 2102212464, %v167
    %v180 = vshrl.u32 920167782, %v168
    %v181 = vor.u32 %v179, %v180
    %v182 = vshll.u32 920167782, %v167
    %v183 = vshrl.u32 1326507024, %v168
    %v184 = vor.u32 %v182, %v183
    %vm185 = vcmp.lt.s32.totalorder %v166, 1
    %vm186 = vcmp.lt.s32.totalorder %v166, 2
    %vm187 = vcmp.lt.s32.totalorder %v166, 3
    %vm188 = vcmp.lt.s32.totalorder %v166, 4
    %v189 = vsel %vm185, %v169, %v172
    %v190 = vsel %vm188, %v178, 2102212464
    %v191 = vsel %vm187, %v175, %v190
    %v192 = vsel %vm186, %v189, %v191
    %v193 = vsel %vm185, %v172, %v175
    %v194 = vsel %vm188, %v181, 920167782
    %v195 = vsel %vm187, %v178, %v194
    %v196 = vsel %vm186, %v193, %v195
    %v197 = vsel %vm185, %v175, %v178
    %v198 = vsel %vm188, %v184, 1326507024
    %v199 = vsel %vm187, %v181, %v198
    %v200 = vsel %vm186, %v197, %v199
    %v201 = vshll.u32 %v161, 8
    %v202 = vmul.u32.u64.compose %v201, %v200
    %v203 = vextract.low.u32 %v202
    %v204 = vextract.high.u32 %v202
    %v205 = vmul.u32.u64.compose %v201, %v196
    %v206 = vextract.low.u32 %v205
    %v207 = vextract.high.u32 %v205
    %v208 = vmul.u32 %v201, %v192
    %v209 = vadd.s32 %v204, %v206
    %vm210 = vc.u32 %v204, %v206
    %v211 = vadd.s32 %v207, 1
    %v212 = vsel %vm210, %v211, %v207
    %v213 = vadd.s32 %v208, %v212
    %v214 = vadd.s32 %v213, 536870912
    %v215 = vshrl.u32 %v214, 30
    %v216 = vshll.u32 %v215, 30
    %v217 = vsub.s32 %v213, %v216
    %vm218 = vcmp.lt.s32.totalorder %v217, 0
    %v219 = vsub.s32 0, %v217
    %v220 = vsel %vm218, %v219, %v217
    %v221 = vclz %v220
    %v222 = vsub.s32 %v221, 2
    %vm223 = vcmp.gt.s32.totalorder 0, %v222
    %v224 = vsel %vm223, 0, %v222
    %v225 = vsub.s32 32, %v224
    %v226 = vshll.u32 %v217, %v224
    %v227 = vshrl.u32 %v209, %v225
    %v228 = vor.u32 %v226, %v227
    %v229 = vsub.s32 4294967266, %v224
    %v230 = vadd.s32 %v229, 127
    %v231 = vshll.u32 %v230, 23
    %v232 = vor.u32 4788187, %v231
    %v233 = vand.u32 2147483647, %v232
    %v235 = vcvt.s32.f32 %v228
    %v236 = vmul.f32 %v235, %v233
    %v237 = vxor.u32 %v236, 2147483648
    %v238 = vsel %vm155, %v237, %v236
    %v239 = vsub.s32 4, %v215
    %v240 = vsel %vm155, %v239, %v215
    %v241 = vsel %vm154, %v47, %v238
    %v242 = vsel %vm154, 0, %v240
    %v243 = vcosq.f32.pop %v241
    %v244 = vsinq.f32.pop %v241
    %vm245 = vweird.f32 %v47
    %v246 = vand.u32 %v242, 3
    %vm247 = vcmp.lt.s32.totalorder %v246, 2
    %vm248 = vcmp.eq.s32.totalorder %v246, 0
    %v249 = vxor.u32 %v244, 2147483648
    %v250 = vsel %vm248, %v243, %v249
    %vm251 = vcmp.eq.s32.totalorder %v246, 2
    %v252 = vxor.u32 %v243, 2147483648
    %v253 = vsel %vm251, %v252, %v244
    %v254 = vsel %vm247, %v250, %v253
    %v255 = vsel %vm245, nan, %v254
    %v256 = vsel %vm48, %v152, %v255
    %v257 = vld [vmem:[#allocation2] sm:$0xff]
    %v258 = vadd.f32 %v257, %v256
    %vm259 = vcmask 523264
    %260 = vst.msk [vmem:[#allocation5] sm:$0xff] %vm259, %v258
    // Predicated region
    $region10: #{tpu_custom_call.1} parent=1 // pred_check
      _
    $region11: #{tpu_custom_call.1} parent=1 // pred_check_branch
      %262 = sbr.rel (0) target = $region13
    $region12: #{tpu_custom_call.1} parent=1 // pred_region
      %s264 = ssub.s32 128, 128
      %265 = vsyncadd [#allocation4], %s264
      %s267 = sshll.u32 [#allocation5], 4
      %s268 = int_to_ptr.vmem [resolvable:$true] %s267
      %270 = dma.vmem_to_hbm [thread:$0]  %s268, 128, %s1, [#allocation4]
    $region13: #{tpu_custom_call.1} parent=1 // pred_fallthru
      _
    // Predicated region
    $region14: #{tpu_custom_call.1} parent=1 // pred_check
      _
    $region15: #{tpu_custom_call.1} parent=1 // pred_check_branch
      %272 = sbr.rel (0) target = $region17
    $region16: #{tpu_custom_call.1} parent=1 // pred_region
      %273 = dma.done [#allocation4], 128
    $region17: #{tpu_custom_call.1} parent=1 // pred_fallthru
      _
    %274 = vsyncpa [#allocation3], 1
    %275 = vsyncpa [#allocation4], 1

</llo_original>
